<compile_context>
chip_gen: v7x
topology: tpu7x:2x2x1
jax: 0.10.0
libtpu: 0.0.40
codegen_flags: <defaults>
</compile_context>

<pallas_src>
import jax
import jax.numpy as jnp
from jax.experimental import pallas as pl
from jax.experimental.pallas import tpu as pltpu


def encoder_kernel(x_ref, w1_ref, b1_ref, w2_ref, b2_ref, o_ref):
    # Two MXU matmuls + VPU bias/ReLU on the current (tm, D_in) batch tile.
    # Accumulation, bias add and ReLU are f32 regardless of the streamed dtype.
    h = jnp.dot(x_ref[...], w1_ref[...], preferred_element_type=jnp.float32)
    h = jnp.maximum(h + b1_ref[...], 0.0)
    y = jnp.dot(h, w2_ref[...], preferred_element_type=jnp.float32)
    o_ref[...] = (y + b2_ref[...]).astype(o_ref.dtype)


def _round_up(n, m):
    return ((n + m - 1) // m) * m


def _vmem_cap_bytes():
    # Generation-aware cap: ~50% of physical VMEM (32 MiB on v7x, 64 MiB on
    # v5e/v6e).  Conservative fallback if the query is unavailable.
    try:
        cap = getattr(pltpu.get_tpu_info(), "vmem_capacity_bytes", None)
        if cap:
            return int(cap) // 2
    except Exception:
        pass
    return 32 << 20


def prepare_params(w1, b1, w2, b2, compute_dtype=jnp.float32):
    """Format params once (hoists tiny casts/reshapes out of the per-call path).

    `compute_dtype` is the dtype W1 is streamed/multiplied in; pass x in the
    same dtype.  Biases and W2 stay f32 (they are tiny and the accumulate path
    is f32 anyway).
    """
    H = w1.shape[-1]
    C = w2.shape[-1]
    return (w1.astype(compute_dtype),
            b1.astype(jnp.float32).reshape(1, H),
            w2.astype(jnp.float32),
            b2.astype(jnp.float32).reshape(1, C))


def encoder_forward(x, w1, b1, w2, b2, *, tm=None):
    """relu(x @ w1 + b1) @ w2 + b2.

    x: (B, D_in) f32 or bf16 — streamed exactly as supplied (no wrapper-side
    cast/pad, so no extra HBM pass over the big operand).
    w1: (D_in, H); b1: (1, H); w2: (H, C); b2: (1, C).  Output is (B, C) f32.
    """
    B, D_in = x.shape
    H = w1.shape[-1]
    C = w2.shape[-1]

    itemsize = jnp.dtype(x.dtype).itemsize
    row_gran = 8 * (4 // itemsize)          # f32: 8-row sublane tiles; bf16: 16
    lane = 128

    # ---- batch tile selection ------------------------------------------------
    # Large tiles amortize the ~0.35 us per-grid-step overhead of this HBM-bound
    # kernel; bf16 halves bytes/row so it takes a 2x larger tile for ~3.2 MB.
    if tm is None:
        tm = 2048 if itemsize == 2 else 1024
    tm_eff = min(int(tm), _round_up(B, row_gran))
    tm_eff = max(_round_up(tm_eff, row_gran), row_gran)
    # Guarantee >= 2 grid steps when the batch allows it so the "parallel" batch
    # axis can be sharded across both v7x TensorCores (harmless on v5e/v6e).
    if pl.cdiv(B, tm_eff) < 2 and B >= 2 * row_gran:
        tm_eff = _round_up(pl.cdiv(B, 2), row_gran)
    grid = (pl.cdiv(B, tm_eff),)            # no padding: partial last block is masked

    # Tiny operands: cast W1 to the streamed dtype, normalize bias shapes.
    # (No-ops if prepare_params was used; folded/CSE'd under jit either way.)
    w1c = w1 if w1.dtype == x.dtype else w1.astype(x.dtype)
    b1c = b1.astype(jnp.float32).reshape(1, H)
    w2c = w2.astype(jnp.float32)
    b2c = b2.astype(jnp.float32).reshape(1, C)

    # ---- VMEM budget (includes the lane-padded f32 intermediate) --------------
    vmem_bytes = (
        2 * tm_eff * D_in * itemsize                       # double-buffered x tiles
        + 2 * tm_eff * _round_up(C, lane) * 4              # double-buffered out tiles
        + 2 * tm_eff * _round_up(H, lane) * 4              # f32 h / pre-ReLU temporaries
        + 2 * (D_in * _round_up(H, lane) * itemsize        # W1 (pipeline keeps 2 copies)
               + 8 * lane * 4                              # b1 (padded)
               + H * _round_up(C, lane) * 4                # W2 (padded)
               + 8 * lane * 4)                             # b2 (padded)
    )
    compiler_kwargs = dict(dimension_semantics=("parallel",))
    if vmem_bytes + (4 << 20) > (12 << 20):
        # Above (or close to) v5e's 16 MiB scoped default: request explicitly,
        # capped at ~50% of this generation's physical VMEM.
        compiler_kwargs["vmem_limit_bytes"] = int(
            min(vmem_bytes + (8 << 20), _vmem_cap_bytes()))
    # NOTE: resident W1/b1/W2/b2 could use pipeline_mode=pl.Buffered(1) to drop
    # the redundant second weight buffer (~0.4 MB); left at the default to keep
    # lowering portable — the pipeline already skips re-DMA for constant blocks.

    cost = pl.CostEstimate(
        flops=2 * B * D_in * H + 2 * B * H * C,
        transcendentals=0,
        bytes_accessed=(B * D_in * itemsize + D_in * H * itemsize
                        + (H + H * C + C) * 4 + B * C * 4),
    )

    return pl.pallas_call(
        encoder_kernel,
        out_shape=jax.ShapeDtypeStruct((B, C), jnp.float32),
        grid_spec=pltpu.PrefetchScalarGridSpec(
            num_scalar_prefetch=0,
            grid=grid,
            in_specs=[
                pl.BlockSpec((tm_eff, D_in), lambda i: (i, 0)),  # x tile over batch
                pl.BlockSpec((D_in, H), lambda i: (0, 0)),       # W1 (resident)
                pl.BlockSpec((1, H), lambda i: (0, 0)),          # b1
                pl.BlockSpec((H, C), lambda i: (0, 0)),          # W2
                pl.BlockSpec((1, C), lambda i: (0, 0)),          # b2
            ],
            out_specs=pl.BlockSpec((tm_eff, C), lambda i: (i, 0)),
        ),
        compiler_params=pltpu.CompilerParams(**compiler_kwargs),
        cost_estimate=cost,
    )(x, w1c, b1c, w2c, b2c)


def init_params(key, d_in, hiddens):
    """Deterministic synthetic init (uniform, like PyTorch's default range)."""
    k1, k2, k3, k4 = jax.random.split(key, 4)
    h0, h1 = hiddens
    lim1 = 1.0 / jnp.sqrt(d_in)
    lim2 = 1.0 / jnp.sqrt(h0)
    w1 = jax.random.uniform(k1, (d_in, h0), jnp.float32, -lim1, lim1)
    b1 = jax.random.uniform(k2, (1, h0), jnp.float32, -lim1, lim1)
    w2 = jax.random.uniform(k3, (h0, h1), jnp.float32, -lim2, lim2)
    b2 = jax.random.uniform(k4, (1, h1), jnp.float32, -lim2, lim2)
    return w1, b1, w2, b2


if __name__ == "__main__":
    # Module defaults: 28x28x1 images -> D_in = 784, hiddens = [64, 3].
    img_w, img_h, img_c = 28, 28, 1
    hiddens = [64, 3]
    d_in = img_w * img_h * img_c

    key = jax.random.PRNGKey(0)
    kx, kp = jax.random.split(key)
    w1, b1, w2, b2 = init_params(kp, d_in, hiddens)

    batch = 64
    x = jax.random.normal(kx, (batch, d_in), jnp.float32)
    ref = jnp.maximum(x @ w1 + b1, 0.0) @ w2 + b2

    fwd = jax.jit(encoder_forward)

    # f32 path: params formatted once, reused across calls.
    p32 = prepare_params(w1, b1, w2, b2, jnp.float32)
    out = jax.block_until_ready(fwd(x, *p32))
    assert out.shape == (batch, hiddens[1])
    assert jnp.allclose(out, ref, atol=1e-5, rtol=1e-5)

    # Ragged batch: exercises the partial-last-block path (no padding copy of x).
    out_r = jax.block_until_ready(fwd(x[:37], *p32))
    assert out_r.shape == (37, hiddens[1])
    assert jnp.allclose(out_r, ref[:37], atol=1e-5, rtol=1e-5)

    # bf16 streaming path: caller supplies x already in bf16 (the wrapper never
    # casts x, so streamed HBM bytes are actually halved); accumulation is f32.
    pbf = prepare_params(w1, b1, w2, b2, jnp.bfloat16)
    out_bf = jax.block_until_ready(fwd(x.astype(jnp.bfloat16), *pbf))
    assert out_bf.shape == (batch, hiddens[1])
    assert jnp.allclose(out_bf, ref, atol=5e-2, rtol=5e-2)

    print("KERNEL_OK")
</pallas_src>

<mosaic_0001>
module attributes {stable_mosaic.version = 11 : i64} {
  func.func @encoder_kernel(%arg0: i32, %arg1: memref<32x784xf32, #tpu.memory_space<vmem>>, %arg2: memref<784x64xf32, #tpu.memory_space<vmem>>, %arg3: memref<1x64xf32, #tpu.memory_space<vmem>>, %arg4: memref<64x3xf32, #tpu.memory_space<vmem>>, %arg5: memref<1x3xf32, #tpu.memory_space<vmem>>, %arg6: memref<32x3xf32, #tpu.memory_space<vmem>>) attributes {dimension_semantics = [#tpu.dimension_semantics<parallel>], iteration_bounds = array<i64: 2>, scalar_prefetch = 0 : i64, scratch_operands = 0 : i64, tpu.core_type = #tpu.core_type<tc>, window_params = [{transform_indices = @transform_0, window_bounds = array<i64: 32, 784>}, {pipeline_mode = #tpu.pipeline_mode<synchronous>, transform_indices = @transform_1, window_bounds = array<i64: 784, 64>}, {pipeline_mode = #tpu.pipeline_mode<synchronous>, transform_indices = @transform_2, window_bounds = array<i64: 1, 64>}, {pipeline_mode = #tpu.pipeline_mode<synchronous>, transform_indices = @transform_3, window_bounds = array<i64: 64, 3>}, {pipeline_mode = #tpu.pipeline_mode<synchronous>, transform_indices = @transform_4, window_bounds = array<i64: 1, 3>}, {transform_indices = @transform_5, window_bounds = array<i64: 32, 3>}]} {
    %c0 = arith.constant 0 : index
    %c0_0 = arith.constant 0 : index
    %0 = vector.load %arg1[%c0, %c0_0] : memref<32x784xf32, #tpu.memory_space<vmem>>, vector<32x784xf32>
    %c0_1 = arith.constant 0 : index
    %c0_2 = arith.constant 0 : index
    %1 = vector.load %arg2[%c0_1, %c0_2] : memref<784x64xf32, #tpu.memory_space<vmem>>, vector<784x64xf32>
    %cst = arith.constant dense<0.000000e+00> : vector<32x64xf32>
    %2 = tpu.matmul %0, %1, %cst {dimension_numbers = #tpu.dot_dimension_numbers<[1], [0], [0], [1], [0, 0, 1, 1], [], []>} : vector<32x784xf32>, vector<784x64xf32>, vector<32x64xf32> -> vector<32x64xf32>
    %c0_3 = arith.constant 0 : index
    %c0_4 = arith.constant 0 : index
    %3 = vector.load %arg3[%c0_3, %c0_4] : memref<1x64xf32, #tpu.memory_space<vmem>>, vector<1x64xf32>
    %4 = vector.broadcast %3 : vector<1x64xf32> to vector<32x64xf32>
    %5 = arith.addf %2, %4 : vector<32x64xf32>
    %cst_5 = arith.constant 0.000000e+00 : f32
    %6 = vector.broadcast %cst_5 : f32 to vector<32x64xf32>
    %7 = arith.maximumf %5, %6 : vector<32x64xf32>
    %c0_6 = arith.constant 0 : index
    %c0_7 = arith.constant 0 : index
    %8 = vector.load %arg4[%c0_6, %c0_7] : memref<64x3xf32, #tpu.memory_space<vmem>>, vector<64x3xf32>
    %cst_8 = arith.constant dense<0.000000e+00> : vector<32x3xf32>
    %9 = tpu.matmul %7, %8, %cst_8 {dimension_numbers = #tpu.dot_dimension_numbers<[1], [0], [0], [1], [0, 0, 1, 1], [], []>} : vector<32x64xf32>, vector<64x3xf32>, vector<32x3xf32> -> vector<32x3xf32>
    %c0_9 = arith.constant 0 : index
    %c0_10 = arith.constant 0 : index
    %10 = vector.load %arg5[%c0_9, %c0_10] : memref<1x3xf32, #tpu.memory_space<vmem>>, vector<1x3xf32>
    %11 = vector.broadcast %10 : vector<1x3xf32> to vector<32x3xf32>
    %12 = arith.addf %9, %11 : vector<32x3xf32>
    %c0_11 = arith.constant 0 : index
    %c0_12 = arith.constant 0 : index
    %13 = vector.load %arg6[%c0_11, %c0_12] : memref<32x3xf32, #tpu.memory_space<vmem>>, vector<32x3xf32>
    tpu.vector_store %arg6[%c0_11, %c0_12], %12 {strides = array<i32>} : memref<32x3xf32, #tpu.memory_space<vmem>>, vector<32x3xf32>,
    return
  }
  func.func @transform_0(%arg0: i32) -> (i32, i32) {
    %c0_i32 = arith.constant 0 : i32
    %c0_i32_0 = arith.constant 0 : i32
    return %arg0, %c0_i32 : i32, i32
  }
  func.func @transform_1(%arg0: i32) -> (i32, i32) {
    %c0_i32 = arith.constant 0 : i32
    %c0_i32_0 = arith.constant 0 : i32
    %c0_i32_1 = arith.constant 0 : i32
    return %c0_i32, %c0_i32_0 : i32, i32
  }
  func.func @transform_2(%arg0: i32) -> (i32, i32) {
    %c0_i32 = arith.constant 0 : i32
    %c0_i32_0 = arith.constant 0 : i32
    %c0_i32_1 = arith.constant 0 : i32
    return %c0_i32, %c0_i32_0 : i32, i32
  }
  func.func @transform_3(%arg0: i32) -> (i32, i32) {
    %c0_i32 = arith.constant 0 : i32
    %c0_i32_0 = arith.constant 0 : i32
    %c0_i32_1 = arith.constant 0 : i32
    return %c0_i32, %c0_i32_0 : i32, i32
  }
  func.func @transform_4(%arg0: i32) -> (i32, i32) {
    %c0_i32 = arith.constant 0 : i32
    %c0_i32_0 = arith.constant 0 : i32
    %c0_i32_1 = arith.constant 0 : i32
    return %c0_i32, %c0_i32_0 : i32, i32
  }
  func.func @transform_5(%arg0: i32) -> (i32, i32) {
    %c0_i32 = arith.constant 0 : i32
    %c0_i32_0 = arith.constant 0 : i32
    return %arg0, %c0_i32 : i32, i32
  }
}

</mosaic_0001>

<llo_original>
// kernel: encoder_forward.1
$region0: #{encoder_forward.1}
  #allocation0 [shape = 'u32[]', space=smem, size = 0x4, offset = 0x4, fixed_abs, tag = 'smem constant byte address 0x4 - core index']
  #allocation1 [shape = 'u32[144,128]{1,0:T(1,128)}', space=vmem, size = 0x12000, scoped, tag = 'internal scratch']
  %s0 = inlined_call_operand.vmem [shape: f32[64,784], index: 0, kind: input, shape index: {}]
  %s1 = inlined_call_operand.vmem [shape: f32[784,64], index: 1, kind: input, shape index: {}]
  %s2 = inlined_call_operand.vmem [shape: f32[1,64], index: 2, kind: input, shape index: {}]
  %s3 = inlined_call_operand.vmem [shape: f32[64,3], index: 3, kind: input, shape index: {}]
  %s4 = inlined_call_operand.vmem [shape: f32[1,3], index: 4, kind: input, shape index: {}]
  %s5 = inlined_call_operand.vmem [shape: f32[64,3], index: 5, kind: output, shape index: {}]
  %s6 = sld [smem:[#allocation0]]
  $region53: #{encoder_forward.1} parent=0
    _
  %s8 = ssub.s32 1, %s6
  %s9 = scalar_select 0, %s8, %s6
  loop: start=0, step=1, limit=4
  $region2: #{encoder_forward.1} parent=0 // loop_pre_header
    _
  $region3: #{encoder_forward.1} parent=0 // loop_header
    %s11 = sphi 0, %s15
    %p12 = scmp.ge.s32.totalorder %s11, 4
    %s21 = sphi 0, %s23
    %s24 = sphi 0, %s21
    %s25 = sphi 0, %s24
    %s41 = sphi 0, %s25
    %s45 = sphi 0, %s45
    %s47 = sphi 0, %s45
    %s48 = sphi 0, %s47
    %s62 = sphi 0, %s48
    %s66 = sphi 0, %s66
    %s68 = sphi 0, %s66
    %s69 = sphi 0, %s68
    %s83 = sphi 0, %s69
    %s87 = sphi 0, %s87
    %s89 = sphi 0, %s87
    %s90 = sphi 0, %s89
    %s104 = sphi 0, %s90
    %s108 = sphi 0, %s108
    %s110 = sphi 0, %s108
    %s111 = sphi 0, %s110
    %s125 = sphi 0, %s111
    %s131 = sphi 0, %s133
    %s134 = sphi 0, %s131
    %s135 = sphi 0, %s134
    %s151 = sphi 0, %s135
  $region4: #{encoder_forward.1} parent=0 // loop_header_branch
    %14 = sbr.rel (%p12) target = $region8
  $region5: #{encoder_forward.1} parent=0 // loop_body
    %s16 = ssub.s32 %s11, 1
    %s17 = ssub.s32 %s11, 2
    %s18 = sadd.s32 %s11, 1
    %s19 = ssub.s32 %s11, %s18
    %p20 = scmp.eq.s32.totalorder %s19, 0
    %s22 = sadd.s32 %s21, 1
    %s23 = scalar_select %p20, %s21, %s22
    %p26 = pneg %p20
    %p27 = scmp.eq.s32.totalorder %s11, 1
    %p28 = por %p26, %p27
    %p29 = scmp.ne.s32.totalorder %s21, %s24
    %p30 = scmp.eq.s32.totalorder %s11, 0
    %p31 = por %p29, %p30
    %p32 = scmp.ne.s32.totalorder %s21, %s24
    %p33 = scmp.eq.s32.totalorder %s16, 1
    %p34 = por %p32, %p33
    %p35 = scmp.ne.s32.totalorder %s24, %s25
    %p36 = scmp.eq.s32.totalorder %s16, 0
    %p37 = por %p35, %p36
    %p38 = scmp.ne.s32.totalorder %s24, %s25
    %p39 = scmp.eq.s32.totalorder %s17, 1
    %p40 = por %p38, %p39
    %p42 = scmp.ne.s32.totalorder %s25, %s41
    %p43 = scmp.eq.s32.totalorder %s17, 0
    %p44 = por %p42, %p43
    %s46 = sadd.s32 %s45, 1
    %p49 = scmp.eq.s32.totalorder %s11, 1
    %p50 = scmp.ne.s32.totalorder %s45, %s47
    %p51 = scmp.eq.s32.totalorder %s11, 0
    %p52 = por %p50, %p51
    %p53 = scmp.ne.s32.totalorder %s45, %s47
    %p54 = scmp.eq.s32.totalorder %s16, 1
    %p55 = por %p53, %p54
    %p56 = scmp.ne.s32.totalorder %s47, %s48
    %p57 = scmp.eq.s32.totalorder %s16, 0
    %p58 = por %p56, %p57
    %p59 = scmp.ne.s32.totalorder %s47, %s48
    %p60 = scmp.eq.s32.totalorder %s17, 1
    %p61 = por %p59, %p60
    %p63 = scmp.ne.s32.totalorder %s48, %s62
    %p64 = scmp.eq.s32.totalorder %s17, 0
    %p65 = por %p63, %p64
    %s67 = sadd.s32 %s66, 1
    %p70 = scmp.eq.s32.totalorder %s11, 1
    %p71 = scmp.ne.s32.totalorder %s66, %s68
    %p72 = scmp.eq.s32.totalorder %s11, 0
    %p73 = por %p71, %p72
    %p74 = scmp.ne.s32.totalorder %s66, %s68
    %p75 = scmp.eq.s32.totalorder %s16, 1
    %p76 = por %p74, %p75
    %p77 = scmp.ne.s32.totalorder %s68, %s69
    %p78 = scmp.eq.s32.totalorder %s16, 0
    %p79 = por %p77, %p78
    %p80 = scmp.ne.s32.totalorder %s68, %s69
    %p81 = scmp.eq.s32.totalorder %s17, 1
    %p82 = por %p80, %p81
    %p84 = scmp.ne.s32.totalorder %s69, %s83
    %p85 = scmp.eq.s32.totalorder %s17, 0
    %p86 = por %p84, %p85
    %s88 = sadd.s32 %s87, 1
    %p91 = scmp.eq.s32.totalorder %s11, 1
    %p92 = scmp.ne.s32.totalorder %s87, %s89
    %p93 = scmp.eq.s32.totalorder %s11, 0
    %p94 = por %p92, %p93
    %p95 = scmp.ne.s32.totalorder %s87, %s89
    %p96 = scmp.eq.s32.totalorder %s16, 1
    %p97 = por %p95, %p96
    %p98 = scmp.ne.s32.totalorder %s89, %s90
    %p99 = scmp.eq.s32.totalorder %s16, 0
    %p100 = por %p98, %p99
    %p101 = scmp.ne.s32.totalorder %s89, %s90
    %p102 = scmp.eq.s32.totalorder %s17, 1
    %p103 = por %p101, %p102
    %p105 = scmp.ne.s32.totalorder %s90, %s104
    %p106 = scmp.eq.s32.totalorder %s17, 0
    %p107 = por %p105, %p106
    %s109 = sadd.s32 %s108, 1
    %p112 = scmp.eq.s32.totalorder %s11, 1
    %p113 = scmp.ne.s32.totalorder %s108, %s110
    %p114 = scmp.eq.s32.totalorder %s11, 0
    %p115 = por %p113, %p114
    %p116 = scmp.ne.s32.totalorder %s108, %s110
    %p117 = scmp.eq.s32.totalorder %s16, 1
    %p118 = por %p116, %p117
    %p119 = scmp.ne.s32.totalorder %s110, %s111
    %p120 = scmp.eq.s32.totalorder %s16, 0
    %p121 = por %p119, %p120
    %p122 = scmp.ne.s32.totalorder %s110, %s111
    %p123 = scmp.eq.s32.totalorder %s17, 1
    %p124 = por %p122, %p123
    %p126 = scmp.ne.s32.totalorder %s111, %s125
    %p127 = scmp.eq.s32.totalorder %s17, 0
    %p128 = por %p126, %p127
    %s129 = ssub.s32 %s11, %s18
    %p130 = scmp.eq.s32.totalorder %s129, 0
    %s132 = sadd.s32 %s131, 1
    %s133 = scalar_select %p130, %s131, %s132
    %p136 = pneg %p130
    %p137 = scmp.eq.s32.totalorder %s11, 1
    %p138 = por %p136, %p137
    %p139 = scmp.ne.s32.totalorder %s131, %s134
    %p140 = scmp.eq.s32.totalorder %s11, 0
    %p141 = por %p139, %p140
    %p142 = scmp.ne.s32.totalorder %s131, %s134
    %p143 = scmp.eq.s32.totalorder %s16, 1
    %p144 = por %p142, %p143
    %p145 = scmp.ne.s32.totalorder %s134, %s135
    %p146 = scmp.eq.s32.totalorder %s16, 0
    %p147 = por %p145, %p146
    %p148 = scmp.ne.s32.totalorder %s134, %s135
    %p149 = scmp.eq.s32.totalorder %s17, 1
    %p150 = por %p148, %p149
    %p152 = scmp.ne.s32.totalorder %s135, %s151
    %p153 = scmp.eq.s32.totalorder %s17, 0
    %p154 = por %p152, %p153
    %p155 = scmp.le.s32.totalorder 1, %s11
    %p156 = scmp.lt.s32.totalorder %s11, 3
    %p157 = pnand %p155, %p156
    %p158 = pneg %p157
    // Predicated region
    $region9: #{encoder_forward.1} parent=5 // pred_check
      _
    $region10: #{encoder_forward.1} parent=5 // pred_check_branch
      %160 = sbr.rel (%p157) target = $region12
    $region11: #{encoder_forward.1} parent=5 // pred_region
      %s161 = ssub.s32 %s11, 1
      // Predicated region
      $region13: #{encoder_forward.1} parent=11 // pred_check
        %p162 = pneg %p58
      $region14: #{encoder_forward.1} parent=11 // pred_check_branch
        %164 = sbr.rel (%p162) target = $region16
      $region15: #{encoder_forward.1} parent=11 // pred_region
        _
      $region16: #{encoder_forward.1} parent=11 // pred_fallthru
        _
      // Predicated region
      $region17: #{encoder_forward.1} parent=11 // pred_check
        %p165 = pneg %p79
      $region18: #{encoder_forward.1} parent=11 // pred_check_branch
        %167 = sbr.rel (%p165) target = $region20
      $region19: #{encoder_forward.1} parent=11 // pred_region
        _
      $region20: #{encoder_forward.1} parent=11 // pred_fallthru
        _
      // Predicated region
      $region21: #{encoder_forward.1} parent=11 // pred_check
        %p168 = pneg %p100
      $region22: #{encoder_forward.1} parent=11 // pred_check_branch
        %170 = sbr.rel (%p168) target = $region24
      $region23: #{encoder_forward.1} parent=11 // pred_region
        _
      $region24: #{encoder_forward.1} parent=11 // pred_fallthru
        _
      // Predicated region
      $region25: #{encoder_forward.1} parent=11 // pred_check
        %p171 = pneg %p121
      $region26: #{encoder_forward.1} parent=11 // pred_check_branch
        %173 = sbr.rel (%p171) target = $region28
      $region27: #{encoder_forward.1} parent=11 // pred_region
        _
      $region28: #{encoder_forward.1} parent=11 // pred_fallthru
        _
    $region12: #{encoder_forward.1} parent=5 // pred_fallthru
      _
    %p174 = scmp.lt.s32.totalorder %s11, 2
    // Predicated region
    $region29: #{encoder_forward.1} parent=5 // pred_check
      %p175 = pneg %p174
    $region30: #{encoder_forward.1} parent=5 // pred_check_branch
      %177 = sbr.rel (%p175) target = $region32
    $region31: #{encoder_forward.1} parent=5 // pred_region
      // Predicated region
      $region33: #{encoder_forward.1} parent=31 // pred_check
        %p178 = pneg %p31
      $region34: #{encoder_forward.1} parent=31 // pred_check_branch
        %180 = sbr.rel (%p178) target = $region36
      $region35: #{encoder_forward.1} parent=31 // pred_region
        %s181 = smul.u32 4, %s11
        %p182 = scmp.lt.s32.totalorder %s181, 7
        %s183 = scalar_select %p182, %s181, 7
        %s184 = smul.addr %s183, 7
        %s185 = smul.addr %s184, 8
        %s186 = scalar_lea.vmem %s0, %s185
        %s187 = smul.u32 4, %s11
      $region36: #{encoder_forward.1} parent=31 // pred_fallthru
        _
    $region32: #{encoder_forward.1} parent=5 // pred_fallthru
      _
    %p188 = scmp.le.s32.totalorder 1, %s11
    %p189 = scmp.lt.s32.totalorder %s11, 3
    %p190 = pnand %p188, %p189
    %p191 = pneg %p190
    // Predicated region
    $region37: #{encoder_forward.1} parent=5 // pred_check
      _
    $region38: #{encoder_forward.1} parent=5 // pred_check_branch
      %193 = sbr.rel (%p190) target = $region40
    $region39: #{encoder_forward.1} parent=5 // pred_region
      %s194 = ssub.s32 %s11, 1
      %s195 = smul.u32 4, %s16
      %p196 = scmp.lt.s32.totalorder %s195, 7
      %s197 = scalar_select %p196, %s195, 7
      %s198 = smul.addr %s197, 7
      %s199 = smul.addr %s198, 8
      %s200 = scalar_lea.vmem %s0, %s199
      %p201 = pneg %p37
      %p202 = pneg %p34
      %p203 = pneg %p58
      %p204 = pneg %p55
      %p205 = pneg %p79
      %p206 = pneg %p76
      %p207 = pneg %p100
      %p208 = pneg %p97
      %p209 = pneg %p121
      %p210 = pneg %p118
      %p211 = pneg %p147
      %p212 = pneg %p144
      %s213 = smul.u32 4, %s16
      %p214 = scmp.lt.s32.totalorder %s213, 7
      %s215 = scalar_select %p214, %s213, 7
      %s216 = smul.addr %s215, 8
      %s217 = scalar_lea.vmem %s5, %s216
      %s218 = smul.u32 4, %s16
      %p219 = scmp.lt.s32.totalorder %s218, 7
      %s220 = scalar_select %p219, %s218, 7
      %s221 = smul.addr %s220, 7
      %s222 = smul.addr %s221, 8
      %s223 = scalar_lea.vmem %s0, %s222
      %s224 = smul.u32 4, %s16
      %s225 = smul.u32 4, %s16
      %p226 = scmp.lt.s32.totalorder %s225, 7
      %s227 = scalar_select %p226, %s225, 7
      %s228 = smul.addr %s227, 8
      %s229 = scalar_lea.vmem %s5, %s228
      %s230 = smul.u32 4, %s16
      %v231 = vld [vmem:[%s223] sm:$0xff]
      %v232 = vld [vmem:[%s223 + $0x8] sm:$0xff]
      %v233 = vld [vmem:[%s223 + $0x10] sm:$0xff]
      %v234 = vld [vmem:[%s223 + $0x18] sm:$0xff]
      %v235 = vld [vmem:[%s223 + $0x20] sm:$0xff]
      %v236 = vld [vmem:[%s223 + $0x28] sm:$0xff]
      %v237 = vld [vmem:[%s223 + $0x30] sm:$0xff]
      %v238 = vld [vmem:[%s223 + $0x38] sm:$0xff]
      %v239 = vld [vmem:[%s223 + $0x40] sm:$0xff]
      %v240 = vld [vmem:[%s223 + $0x48] sm:$0xff]
      %v241 = vld [vmem:[%s223 + $0x50] sm:$0xff]
      %v242 = vld [vmem:[%s223 + $0x58] sm:$0xff]
      %v243 = vld [vmem:[%s223 + $0x60] sm:$0xff]
      %v244 = vld [vmem:[%s223 + $0x68] sm:$0xff]
      %v245 = vld [vmem:[%s223 + $0x70] sm:$0xff]
      %v246 = vld [vmem:[%s223 + $0x78] sm:$0xff]
      %v247 = vld [vmem:[%s223 + $0x80] sm:$0xff]
      %v248 = vld [vmem:[%s223 + $0x88] sm:$0xff]
      %v249 = vld [vmem:[%s223 + $0x90] sm:$0xff]
      %v250 = vld [vmem:[%s223 + $0x98] sm:$0xff]
      %v251 = vld [vmem:[%s223 + $0xa0] sm:$0xff]
      %v252 = vld [vmem:[%s223 + $0xa8] sm:$0xff]
      %v253 = vld [vmem:[%s223 + $0xb0] sm:$0xff]
      %v254 = vld [vmem:[%s223 + $0xb8] sm:$0xff]
      %v255 = vld [vmem:[%s223 + $0xc0] sm:$0xff]
      %v256 = vld [vmem:[%s223 + $0xc8] sm:$0xff]
      %v257 = vld [vmem:[%s223 + $0xd0] sm:$0xff]
      %v258 = vld [vmem:[%s223 + $0xd8] sm:$0xff]
      %v259 = vld [vmem:[%s1] sm:$0xff]
      %v260 = vld [vmem:[%s1 + $0x8] sm:$0xff]
      %v261 = vld [vmem:[%s1 + $0x10] sm:$0xff]
      %v262 = vld [vmem:[%s1 + $0x18] sm:$0xff]
      %v263 = vld [vmem:[%s1 + $0x20] sm:$0xff]
      %v264 = vld [vmem:[%s1 + $0x28] sm:$0xff]
      %v265 = vld [vmem:[%s1 + $0x30] sm:$0xff]
      %v266 = vld [vmem:[%s1 + $0x38] sm:$0xff]
      %v267 = vld [vmem:[%s1 + $0x40] sm:$0xff]
      %v268 = vld [vmem:[%s1 + $0x48] sm:$0xff]
      %v269 = vld [vmem:[%s1 + $0x50] sm:$0xff]
      %v270 = vld [vmem:[%s1 + $0x58] sm:$0xff]
      %v271 = vld [vmem:[%s1 + $0x60] sm:$0xff]
      %v272 = vld [vmem:[%s1 + $0x68] sm:$0xff]
      %v273 = vld [vmem:[%s1 + $0x70] sm:$0xff]
      %v274 = vld [vmem:[%s1 + $0x78] sm:$0xff]
      %v275 = vld [vmem:[%s1 + $0x80] sm:$0xff]
      %v276 = vld [vmem:[%s1 + $0x88] sm:$0xff]
      %v277 = vld [vmem:[%s1 + $0x90] sm:$0xff]
      %v278 = vld [vmem:[%s1 + $0x98] sm:$0xff]
      %v279 = vld [vmem:[%s1 + $0xa0] sm:$0xff]
      %v280 = vld [vmem:[%s1 + $0xa8] sm:$0xff]
      %v281 = vld [vmem:[%s1 + $0xb0] sm:$0xff]
      %v282 = vld [vmem:[%s1 + $0xb8] sm:$0xff]
      %v283 = vld [vmem:[%s1 + $0xc0] sm:$0xff]
      %v284 = vld [vmem:[%s1 + $0xc8] sm:$0xff]
      %v285 = vld [vmem:[%s1 + $0xd0] sm:$0xff]
      %v286 = vld [vmem:[%s1 + $0xd8] sm:$0xff]
      %v287 = vld [vmem:[%s1 + $0xe0] sm:$0xff]
      %v288 = vld [vmem:[%s1 + $0xe8] sm:$0xff]
      %v289 = vld [vmem:[%s1 + $0xf0] sm:$0xff]
      %v290 = vld [vmem:[%s1 + $0xf8] sm:$0xff]
      %v291 = vld [vmem:[%s1 + $0x100] sm:$0xff]
      %v292 = vld [vmem:[%s1 + $0x108] sm:$0xff]
      %v293 = vld [vmem:[%s1 + $0x110] sm:$0xff]
      %v294 = vld [vmem:[%s1 + $0x118] sm:$0xff]
      %v295 = vld [vmem:[%s1 + $0x120] sm:$0xff]
      %v296 = vld [vmem:[%s1 + $0x128] sm:$0xff]
      %v297 = vld [vmem:[%s1 + $0x130] sm:$0xff]
      %v298 = vld [vmem:[%s1 + $0x138] sm:$0xff]
      %v299 = vld [vmem:[%s1 + $0x140] sm:$0xff]
      %v300 = vld [vmem:[%s1 + $0x148] sm:$0xff]
      %v301 = vld [vmem:[%s1 + $0x150] sm:$0xff]
      %v302 = vld [vmem:[%s1 + $0x158] sm:$0xff]
      %v303 = vld [vmem:[%s1 + $0x160] sm:$0xff]
      %v304 = vld [vmem:[%s1 + $0x168] sm:$0xff]
      %v305 = vld [vmem:[%s1 + $0x170] sm:$0xff]
      %v306 = vld [vmem:[%s1 + $0x178] sm:$0xff]
      %v307 = vld [vmem:[%s1 + $0x180] sm:$0xff]
      %v308 = vld [vmem:[%s1 + $0x188] sm:$0xff]
      %v309 = vld [vmem:[%s1 + $0x190] sm:$0xff]
      %v310 = vld [vmem:[%s1 + $0x198] sm:$0xff]
      %v311 = vld [vmem:[%s1 + $0x1a0] sm:$0xff]
      %v312 = vld [vmem:[%s1 + $0x1a8] sm:$0xff]
      %v313 = vld [vmem:[%s1 + $0x1b0] sm:$0xff]
      %v314 = vld [vmem:[%s1 + $0x1b8] sm:$0xff]
      %v315 = vld [vmem:[%s1 + $0x1c0] sm:$0xff]
      %v316 = vld [vmem:[%s1 + $0x1c8] sm:$0xff]
      %v317 = vld [vmem:[%s1 + $0x1d0] sm:$0xff]
      %v318 = vld [vmem:[%s1 + $0x1d8] sm:$0xff]
      %v319 = vld [vmem:[%s1 + $0x1e0] sm:$0xff]
      %v320 = vld [vmem:[%s1 + $0x1e8] sm:$0xff]
      %v321 = vld [vmem:[%s1 + $0x1f0] sm:$0xff]
      %v322 = vld [vmem:[%s1 + $0x1f8] sm:$0xff]
      %v323 = vld [vmem:[%s1 + $0x200] sm:$0xff]
      %v324 = vld [vmem:[%s1 + $0x208] sm:$0xff]
      %v325 = vld [vmem:[%s1 + $0x210] sm:$0xff]
      %v326 = vld [vmem:[%s1 + $0x218] sm:$0xff]
      %v327 = vld [vmem:[%s1 + $0x220] sm:$0xff]
      %v328 = vld [vmem:[%s1 + $0x228] sm:$0xff]
      %v329 = vld [vmem:[%s1 + $0x230] sm:$0xff]
      %v330 = vld [vmem:[%s1 + $0x238] sm:$0xff]
      %v331 = vld [vmem:[%s1 + $0x240] sm:$0xff]
      %v332 = vld [vmem:[%s1 + $0x248] sm:$0xff]
      %v333 = vld [vmem:[%s1 + $0x250] sm:$0xff]
      %v334 = vld [vmem:[%s1 + $0x258] sm:$0xff]
      %v335 = vld [vmem:[%s1 + $0x260] sm:$0xff]
      %v336 = vld [vmem:[%s1 + $0x268] sm:$0xff]
      %v337 = vld [vmem:[%s1 + $0x270] sm:$0xff]
      %v338 = vld [vmem:[%s1 + $0x278] sm:$0xff]
      %v339 = vld [vmem:[%s1 + $0x280] sm:$0xff]
      %v340 = vld [vmem:[%s1 + $0x288] sm:$0xff]
      %v341 = vld [vmem:[%s1 + $0x290] sm:$0xff]
      %v342 = vld [vmem:[%s1 + $0x298] sm:$0xff]
      %v343 = vld [vmem:[%s1 + $0x2a0] sm:$0xff]
      %v344 = vld [vmem:[%s1 + $0x2a8] sm:$0xff]
      %v345 = vld [vmem:[%s1 + $0x2b0] sm:$0xff]
      %v346 = vld [vmem:[%s1 + $0x2b8] sm:$0xff]
      %v347 = vld [vmem:[%s1 + $0x2c0] sm:$0xff]
      %v348 = vld [vmem:[%s1 + $0x2c8] sm:$0xff]
      %v349 = vld [vmem:[%s1 + $0x2d0] sm:$0xff]
      %v350 = vld [vmem:[%s1 + $0x2d8] sm:$0xff]
      %v351 = vld [vmem:[%s1 + $0x2e0] sm:$0xff]
      %v352 = vld [vmem:[%s1 + $0x2e8] sm:$0xff]
      %v353 = vld [vmem:[%s1 + $0x2f0] sm:$0xff]
      %v354 = vld [vmem:[%s1 + $0x2f8] sm:$0xff]
      %v355 = vld [vmem:[%s1 + $0x300] sm:$0xff]
      %v356 = vld [vmem:[%s1 + $0x308] sm:$0xff]
      %v357 = vld [vmem:[%s2] sm:$0x1]
      %v359 = vlaneseq
      %v360 = vshrl.u32 %v359, 7
      %v361 = vsub.s32 0, %v360
      %v362 = vrot.slane %v357, %v361
      %vm364 = vcmask 130048
      %v366 = vsel %vm364, %v237, 0
      %v369 = vsel %vm364, %v244, 0
      %v372 = vsel %vm364, %v251, 0
      %v375 = vsel %vm364, %v258, 0
      %377 = vmatprep.subr.mxu0 0.0
      %378 = vmatpush1.msra.mxu0 %v259
      %379 = vmatprep.subr.mxu0 0.0
      %380 = vmatpush1.msra.mxu0 %v260
      %381 = vmatprep.subr.mxu0 0.0
      %382 = vmatpush1.msra.mxu0 %v261
      %383 = vmatprep.subr.mxu0 0.0
      %384 = vmatpush1.msra.mxu0 %v262
      %385 = vmatprep.subr.mxu0 0.0
      %386 = vmatpush1.msra.mxu0 %v263
      %387 = vmatprep.subr.mxu0 0.0
      %388 = vmatpush1.msra.mxu0 %v264
      %389 = vmatprep.subr.mxu0 0.0
      %390 = vmatpush1.msra.mxu0 %v265
      %391 = vmatprep.subr.mxu0 0.0
      %392 = vmatpush1.msra.mxu0 %v266
      %393 = vmatprep.subr.mxu0 0.0
      %394 = vmatpush1.msra.mxu0 %v267
      %395 = vmatprep.subr.mxu0 0.0
      %396 = vmatpush1.msra.mxu0 %v268
      %397 = vmatprep.subr.mxu0 0.0
      %398 = vmatpush1.msra.mxu0 %v269
      %399 = vmatprep.subr.mxu0 0.0
      %400 = vmatpush1.msra.mxu0 %v270
      %401 = vmatprep.subr.mxu0 0.0
      %402 = vmatpush1.msra.mxu0 %v271
      %403 = vmatprep.subr.mxu0 0.0
      %404 = vmatpush1.msra.mxu0 %v272
      %405 = vmatprep.subr.mxu0 0.0
      %406 = vmatpush1.msra.mxu0 %v273
      %407 = vmatprep.subr.mxu0 0.0
      %408 = vmatpush1.msra.mxu0 %v274
      %409 = vmatprep.subr.mxu0 0.0
      %410 = vmatpush1.msra.mxu0 %v275
      %411 = vmatprep.subr.mxu0 0.0
      %412 = vmatpush1.msra.mxu0 %v276
      %413 = vmatprep.subr.mxu0 0.0
      %414 = vmatpush1.msra.mxu0 %v277
      %415 = vmatprep.subr.mxu0 0.0
      %416 = vmatpush1.msra.mxu0 %v278
      %417 = vmatprep.subr.mxu0 0.0
      %418 = vmatpush1.msra.mxu0 %v279
      %419 = vmatprep.subr.mxu0 0.0
      %420 = vmatpush1.msra.mxu0 %v280
      %421 = vmatprep.subr.mxu0 0.0
      %422 = vmatpush1.msra.mxu0 %v281
      %423 = vmatprep.subr.mxu0 0.0
      %424 = vmatpush1.msra.mxu0 %v282
      %425 = vmatprep.subr.mxu0 0.0
      %426 = vmatpush1.msra.mxu0 %v283
      %427 = vmatprep.subr.mxu0 0.0
      %428 = vmatpush1.msra.mxu0 %v284
      %429 = vmatprep.subr.mxu0 0.0
      %430 = vmatpush1.msra.mxu0 %v285
      %431 = vmatprep.subr.mxu0 0.0
      %432 = vmatpush1.msra.mxu0 %v286
      %433 = vmatprep.subr.mxu0 0.0
      %434 = vmatpush1.msra.mxu0 %v287
      %435 = vmatprep.subr.mxu0 0.0
      %436 = vmatpush1.msra.mxu0 %v288
      %437 = vmatprep.subr.mxu0 0.0
      %438 = vmatpush1.msra.mxu0 %v289
      %439 = vmatprep.subr.mxu0 0.0
      %440 = vmatpush1.msra.mxu0 %v290
      %441 = vmatprep.mubr.f32.mxu0 %v232
      %442 = vmatmul.mubr.f32.gmra.mrb[0].mxu0 %v231
      %v443 = vpop.f32.mrb[0].mxu0
      %v444 = vadd.f32 %v362, %v443
      %v445 = vpop.f32.mrb[0].mxu0
      %446 = vmatprep.mubr.f32.mxu0 %v239
      %447 = vmatmul.mubr.f32.gmra.mrb[0].mxu0 %v238
      %v448 = vpop.f32.mrb[0].mxu0
      %v449 = vadd.f32 %v362, %v448
      %v450 = vpop.f32.mrb[0].mxu0
      %451 = vmatprep.mubr.f32.mxu0 %v246
      %452 = vmatmul.mubr.f32.gmra.mrb[0].mxu0 %v245
      %v453 = vpop.f32.mrb[0].mxu0
      %v454 = vadd.f32 %v362, %v453
      %v455 = vpop.f32.mrb[0].mxu0
      %456 = vmatprep.mubr.f32.mxu0 %v253
      %457 = vmatmul.mubr.f32.gmra.mrb[0].mxu0 %v252
      %v458 = vpop.f32.mrb[0].mxu0
      %v459 = vadd.f32 %v362, %v458
      %v460 = vpop.f32.mrb[0].mxu0
      %461 = vdwg.mxu0
      %462 = vmatprep.subr.mxu0 0.0
      %463 = vmatpush1.msra.mxu0 %v291
      %464 = vmatprep.subr.mxu0 0.0
      %465 = vmatpush1.msra.mxu0 %v292
      %466 = vmatprep.subr.mxu0 0.0
      %467 = vmatpush1.msra.mxu0 %v293
      %468 = vmatprep.subr.mxu0 0.0
      %469 = vmatpush1.msra.mxu0 %v294
      %470 = vmatprep.subr.mxu0 0.0
      %471 = vmatpush1.msra.mxu0 %v295
      %472 = vmatprep.subr.mxu0 0.0
      %473 = vmatpush1.msra.mxu0 %v296
      %474 = vmatprep.subr.mxu0 0.0
      %475 = vmatpush1.msra.mxu0 %v297
      %476 = vmatprep.subr.mxu0 0.0
      %477 = vmatpush1.msra.mxu0 %v298
      %478 = vmatprep.subr.mxu0 0.0
      %479 = vmatpush1.msra.mxu0 %v299
      %480 = vmatprep.subr.mxu0 0.0
      %481 = vmatpush1.msra.mxu0 %v300
      %482 = vmatprep.subr.mxu0 0.0
      %483 = vmatpush1.msra.mxu0 %v301
      %484 = vmatprep.subr.mxu0 0.0
      %485 = vmatpush1.msra.mxu0 %v302
      %486 = vmatprep.subr.mxu0 0.0
      %487 = vmatpush1.msra.mxu0 %v303
      %488 = vmatprep.subr.mxu0 0.0
      %489 = vmatpush1.msra.mxu0 %v304
      %490 = vmatprep.subr.mxu0 0.0
      %491 = vmatpush1.msra.mxu0 %v305
      %492 = vmatprep.subr.mxu0 0.0
      %493 = vmatpush1.msra.mxu0 %v306
      %494 = vmatprep.subr.mxu0 0.0
      %495 = vmatpush1.msra.mxu0 %v307
      %496 = vmatprep.subr.mxu0 0.0
      %497 = vmatpush1.msra.mxu0 %v308
      %498 = vmatprep.subr.mxu0 0.0
      %499 = vmatpush1.msra.mxu0 %v309
      %500 = vmatprep.subr.mxu0 0.0
      %501 = vmatpush1.msra.mxu0 %v310
      %502 = vmatprep.subr.mxu0 0.0
      %503 = vmatpush1.msra.mxu0 %v311
      %504 = vmatprep.subr.mxu0 0.0
      %505 = vmatpush1.msra.mxu0 %v312
      %506 = vmatprep.subr.mxu0 0.0
      %507 = vmatpush1.msra.mxu0 %v313
      %508 = vmatprep.subr.mxu0 0.0
      %509 = vmatpush1.msra.mxu0 %v314
      %510 = vmatprep.subr.mxu0 0.0
      %511 = vmatpush1.msra.mxu0 %v315
      %512 = vmatprep.subr.mxu0 0.0
      %513 = vmatpush1.msra.mxu0 %v316
      %514 = vmatprep.subr.mxu0 0.0
      %515 = vmatpush1.msra.mxu0 %v317
      %516 = vmatprep.subr.mxu0 0.0
      %517 = vmatpush1.msra.mxu0 %v318
      %518 = vmatprep.subr.mxu0 0.0
      %519 = vmatpush1.msra.mxu0 %v319
      %520 = vmatprep.subr.mxu0 0.0
      %521 = vmatpush1.msra.mxu0 %v320
      %522 = vmatprep.subr.mxu0 0.0
      %523 = vmatpush1.msra.mxu0 %v321
      %524 = vmatprep.subr.mxu0 0.0
      %525 = vmatpush1.msra.mxu0 %v322
      %526 = vmatprep.mubr.f32.mxu0 %v234
      %527 = vmatmul.mubr.f32.gmra.mrb[0].mxu0 %v233
      %v528 = vpop.f32.mrb[0].mxu0
      %v529 = vadd.f32 %v444, %v528
      %v530 = vpop.f32.mrb[0].mxu0
      %531 = vmatprep.mubr.f32.mxu0 %v241
      %532 = vmatmul.mubr.f32.gmra.mrb[0].mxu0 %v240
      %v533 = vpop.f32.mrb[0].mxu0
      %v534 = vadd.f32 %v449, %v533
      %v535 = vpop.f32.mrb[0].mxu0
      %536 = vmatprep.mubr.f32.mxu0 %v248
      %537 = vmatmul.mubr.f32.gmra.mrb[0].mxu0 %v247
      %v538 = vpop.f32.mrb[0].mxu0
      %v539 = vadd.f32 %v454, %v538
      %v540 = vpop.f32.mrb[0].mxu0
      %541 = vmatprep.mubr.f32.mxu0 %v255
      %542 = vmatmul.mubr.f32.gmra.mrb[0].mxu0 %v254
      %v543 = vpop.f32.mrb[0].mxu0
      %v544 = vadd.f32 %v459, %v543
      %v545 = vpop.f32.mrb[0].mxu0
      %546 = vdwg.mxu0
      %547 = vmatprep.subr.mxu0 0.0
      %548 = vmatpush1.msra.mxu0 %v323
      %549 = vmatprep.subr.mxu0 0.0
      %550 = vmatpush1.msra.mxu0 %v324
      %551 = vmatprep.subr.mxu0 0.0
      %552 = vmatpush1.msra.mxu0 %v325
      %553 = vmatprep.subr.mxu0 0.0
      %554 = vmatpush1.msra.mxu0 %v326
      %555 = vmatprep.subr.mxu0 0.0
      %556 = vmatpush1.msra.mxu0 %v327
      %557 = vmatprep.subr.mxu0 0.0
      %558 = vmatpush1.msra.mxu0 %v328
      %559 = vmatprep.subr.mxu0 0.0
      %560 = vmatpush1.msra.mxu0 %v329
      %561 = vmatprep.subr.mxu0 0.0
      %562 = vmatpush1.msra.mxu0 %v330
      %563 = vmatprep.subr.mxu0 0.0
      %564 = vmatpush1.msra.mxu0 %v331
      %565 = vmatprep.subr.mxu0 0.0
      %566 = vmatpush1.msra.mxu0 %v332
      %567 = vmatprep.subr.mxu0 0.0
      %568 = vmatpush1.msra.mxu0 %v333
      %569 = vmatprep.subr.mxu0 0.0
      %570 = vmatpush1.msra.mxu0 %v334
      %571 = vmatprep.subr.mxu0 0.0
      %572 = vmatpush1.msra.mxu0 %v335
      %573 = vmatprep.subr.mxu0 0.0
      %574 = vmatpush1.msra.mxu0 %v336
      %575 = vmatprep.subr.mxu0 0.0
      %576 = vmatpush1.msra.mxu0 %v337
      %577 = vmatprep.subr.mxu0 0.0
      %578 = vmatpush1.msra.mxu0 %v338
      %579 = vmatprep.subr.mxu0 0.0
      %580 = vmatpush1.msra.mxu0 %v339
      %581 = vmatprep.subr.mxu0 0.0
      %582 = vmatpush1.msra.mxu0 %v340
      %583 = vmatprep.subr.mxu0 0.0
      %584 = vmatpush1.msra.mxu0 %v341
      %585 = vmatprep.subr.mxu0 0.0
      %586 = vmatpush1.msra.mxu0 %v342
      %587 = vmatprep.subr.mxu0 0.0
      %588 = vmatpush1.msra.mxu0 %v343
      %589 = vmatprep.subr.mxu0 0.0
      %590 = vmatpush1.msra.mxu0 %v344
      %591 = vmatprep.subr.mxu0 0.0
      %592 = vmatpush1.msra.mxu0 %v345
      %593 = vmatprep.subr.mxu0 0.0
      %594 = vmatpush1.msra.mxu0 %v346
      %595 = vmatprep.subr.mxu0 0.0
      %596 = vmatpush1.msra.mxu0 %v347
      %597 = vmatprep.subr.mxu0 0.0
      %598 = vmatpush1.msra.mxu0 %v348
      %599 = vmatprep.subr.mxu0 0.0
      %600 = vmatpush1.msra.mxu0 %v349
      %601 = vmatprep.subr.mxu0 0.0
      %602 = vmatpush1.msra.mxu0 %v350
      %603 = vmatprep.subr.mxu0 0.0
      %604 = vmatpush1.msra.mxu0 %v351
      %605 = vmatprep.subr.mxu0 0.0
      %606 = vmatpush1.msra.mxu0 %v352
      %607 = vmatprep.subr.mxu0 0.0
      %608 = vmatpush1.msra.mxu0 %v353
      %609 = vmatprep.subr.mxu0 0.0
      %610 = vmatpush1.msra.mxu0 %v354
      %611 = vmatprep.mubr.f32.mxu0 %v236
      %612 = vmatmul.mubr.f32.gmra.mrb[0].mxu0 %v235
      %v613 = vpop.f32.mrb[0].mxu0
      %v614 = vadd.f32 %v529, %v613
      %v615 = vpop.f32.mrb[0].mxu0
      %616 = vmatprep.mubr.f32.mxu0 %v243
      %617 = vmatmul.mubr.f32.gmra.mrb[0].mxu0 %v242
      %v618 = vpop.f32.mrb[0].mxu0
      %v619 = vadd.f32 %v534, %v618
      %v620 = vpop.f32.mrb[0].mxu0
      %621 = vmatprep.mubr.f32.mxu0 %v250
      %622 = vmatmul.mubr.f32.gmra.mrb[0].mxu0 %v249
      %v623 = vpop.f32.mrb[0].mxu0
      %v624 = vadd.f32 %v539, %v623
      %v625 = vpop.f32.mrb[0].mxu0
      %626 = vmatprep.mubr.f32.mxu0 %v257
      %627 = vmatmul.mubr.f32.gmra.mrb[0].mxu0 %v256
      %v628 = vpop.f32.mrb[0].mxu0
      %v629 = vadd.f32 %v544, %v628
      %v630 = vpop.f32.mrb[0].mxu0
      %631 = vdwg.mxu0
      %632 = vmatprep.subr.mxu0 0.0
      %633 = vmatpush1.msra.mxu0 %v355
      %634 = vmatprep.subr.mxu0 0.0
      %635 = vmatpush1.msra.mxu0 %v356
      %636 = vmatprep.subr.mxu0 0.0
      %637 = vmatpush1.msra.mxu0 0.0
      %638 = vmatprep.subr.mxu0 0.0
      %639 = vmatpush1.msra.mxu0 0.0
      %640 = vmatprep.subr.mxu0 0.0
      %641 = vmatpush1.msra.mxu0 0.0
      %642 = vmatprep.subr.mxu0 0.0
      %643 = vmatpush1.msra.mxu0 0.0
      %644 = vmatprep.subr.mxu0 0.0
      %645 = vmatpush1.msra.mxu0 0.0
      %646 = vmatprep.subr.mxu0 0.0
      %647 = vmatpush1.msra.mxu0 0.0
      %648 = vmatprep.subr.mxu0 0.0
      %649 = vmatpush1.msra.mxu0 0.0
      %650 = vmatprep.subr.mxu0 0.0
      %651 = vmatpush1.msra.mxu0 0.0
      %652 = vmatprep.subr.mxu0 0.0
      %653 = vmatpush1.msra.mxu0 0.0
      %654 = vmatprep.subr.mxu0 0.0
      %655 = vmatpush1.msra.mxu0 0.0
      %656 = vmatprep.subr.mxu0 0.0
      %657 = vmatpush1.msra.mxu0 0.0
      %658 = vmatprep.subr.mxu0 0.0
      %659 = vmatpush1.msra.mxu0 0.0
      %660 = vmatprep.subr.mxu0 0.0
      %661 = vmatpush1.msra.mxu0 0.0
      %662 = vmatprep.subr.mxu0 0.0
      %663 = vmatpush1.msra.mxu0 0.0
      %664 = vmatprep.subr.mxu0 0.0
      %665 = vmatpush1.msra.mxu0 0.0
      %666 = vmatprep.subr.mxu0 0.0
      %667 = vmatpush1.msra.mxu0 0.0
      %668 = vmatprep.subr.mxu0 0.0
      %669 = vmatpush1.msra.mxu0 0.0
      %670 = vmatprep.subr.mxu0 0.0
      %671 = vmatpush1.msra.mxu0 0.0
      %672 = vmatprep.subr.mxu0 0.0
      %673 = vmatpush1.msra.mxu0 0.0
      %674 = vmatprep.subr.mxu0 0.0
      %675 = vmatpush1.msra.mxu0 0.0
      %676 = vmatprep.subr.mxu0 0.0
      %677 = vmatpush1.msra.mxu0 0.0
      %678 = vmatprep.subr.mxu0 0.0
      %679 = vmatpush1.msra.mxu0 0.0
      %680 = vmatprep.subr.mxu0 0.0
      %681 = vmatpush1.msra.mxu0 0.0
      %682 = vmatprep.subr.mxu0 0.0
      %683 = vmatpush1.msra.mxu0 0.0
      %684 = vmatprep.subr.mxu0 0.0
      %685 = vmatpush1.msra.mxu0 0.0
      %686 = vmatprep.subr.mxu0 0.0
      %687 = vmatpush1.msra.mxu0 0.0
      %688 = vmatprep.subr.mxu0 0.0
      %689 = vmatpush1.msra.mxu0 0.0
      %690 = vmatprep.subr.mxu0 0.0
      %691 = vmatpush1.msra.mxu0 0.0
      %692 = vmatprep.subr.mxu0 0.0
      %693 = vmatpush1.msra.mxu0 0.0
      %694 = vmatprep.subr.mxu0 0.0
      %695 = vmatpush1.msra.mxu0 0.0
      %696 = vmatprep.mubr.f32.mxu0 0.0
      %697 = vmatmul.mubr.f32.gmra.mrb[0].mxu0 %v366
      %v698 = vpop.f32.mrb[0].mxu0
      %v699 = vadd.f32 %v614, %v698
      %v700 = vpop.f32.mrb[0].mxu0
      %701 = vmatprep.mubr.f32.mxu0 0.0
      %702 = vmatmul.mubr.f32.gmra.mrb[0].mxu0 %v369
      %v703 = vpop.f32.mrb[0].mxu0
      %v704 = vadd.f32 %v619, %v703
      %v705 = vpop.f32.mrb[0].mxu0
      %706 = vmatprep.mubr.f32.mxu0 0.0
      %707 = vmatmul.mubr.f32.gmra.mrb[0].mxu0 %v372
      %v708 = vpop.f32.mrb[0].mxu0
      %v709 = vadd.f32 %v624, %v708
      %v710 = vpop.f32.mrb[0].mxu0
      %711 = vmatprep.mubr.f32.mxu0 0.0
      %712 = vmatmul.mubr.f32.gmra.mrb[0].mxu0 %v375
      %v713 = vpop.f32.mrb[0].mxu0
      %v714 = vadd.f32 %v629, %v713
      %v715 = vpop.f32.mrb[0].mxu0
      %716 = vdwg.mxu0
      %v717 = vmax.f32 %v699, 0.0
      %v718 = vmax.f32 %v704, 0.0
      %v719 = vmax.f32 %v709, 0.0
      %v720 = vmax.f32 %v714, 0.0
      %v721 = vld [vmem:[%s3] sm:$0xff]
      %v722 = vld [vmem:[%s3 + $0x8] sm:$0xff]
      %v723 = vld [vmem:[%s3 + $0x10] sm:$0xff]
      %v724 = vld [vmem:[%s3 + $0x18] sm:$0xff]
      %v725 = vld [vmem:[%s3 + $0x20] sm:$0xff]
      %v726 = vld [vmem:[%s3 + $0x28] sm:$0xff]
      %v727 = vld [vmem:[%s3 + $0x30] sm:$0xff]
      %v728 = vld [vmem:[%s3 + $0x38] sm:$0xff]
      %v729 = vld [vmem:[%s4] sm:$0x1]
      %v731 = vlaneseq
      %v732 = vshrl.u32 %v731, 7
      %v733 = vsub.s32 0, %v732
      %v734 = vrot.slane %v729, %v733
      %vm736 = vcmask 523264
      %v738 = vsel %vm736, %v717, 0
      %v741 = vsel %vm736, %v718, 0
      %v744 = vsel %vm736, %v719, 0
      %v747 = vsel %vm736, %v720, 0
      %749 = vmatprep.subr.mxu0 0.0
      %750 = vmatpush1.msra.mxu0 %v721
      %751 = vmatprep.subr.mxu0 0.0
      %752 = vmatpush1.msra.mxu0 %v722
      %753 = vmatprep.subr.mxu0 0.0
      %754 = vmatpush1.msra.mxu0 %v723
      %755 = vmatprep.subr.mxu0 0.0
      %756 = vmatpush1.msra.mxu0 %v724
      %757 = vmatprep.subr.mxu0 0.0
      %758 = vmatpush1.msra.mxu0 %v725
      %759 = vmatprep.subr.mxu0 0.0
      %760 = vmatpush1.msra.mxu0 %v726
      %761 = vmatprep.subr.mxu0 0.0
      %762 = vmatpush1.msra.mxu0 %v727
      %763 = vmatprep.subr.mxu0 0.0
      %764 = vmatpush1.msra.mxu0 %v728
      %765 = vmatprep.subr.mxu0 0.0
      %766 = vmatpush1.msra.mxu0 0.0
      %767 = vmatprep.subr.mxu0 0.0
      %768 = vmatpush1.msra.mxu0 0.0
      %769 = vmatprep.subr.mxu0 0.0
      %770 = vmatpush1.msra.mxu0 0.0
      %771 = vmatprep.subr.mxu0 0.0
      %772 = vmatpush1.msra.mxu0 0.0
      %773 = vmatprep.subr.mxu0 0.0
      %774 = vmatpush1.msra.mxu0 0.0
      %775 = vmatprep.subr.mxu0 0.0
      %776 = vmatpush1.msra.mxu0 0.0
      %777 = vmatprep.subr.mxu0 0.0
      %778 = vmatpush1.msra.mxu0 0.0
      %779 = vmatprep.subr.mxu0 0.0
      %780 = vmatpush1.msra.mxu0 0.0
      %781 = vmatprep.subr.mxu0 0.0
      %782 = vmatpush1.msra.mxu0 0.0
      %783 = vmatprep.subr.mxu0 0.0
      %784 = vmatpush1.msra.mxu0 0.0
      %785 = vmatprep.subr.mxu0 0.0
      %786 = vmatpush1.msra.mxu0 0.0
      %787 = vmatprep.subr.mxu0 0.0
      %788 = vmatpush1.msra.mxu0 0.0
      %789 = vmatprep.subr.mxu0 0.0
      %790 = vmatpush1.msra.mxu0 0.0
      %791 = vmatprep.subr.mxu0 0.0
      %792 = vmatpush1.msra.mxu0 0.0
      %793 = vmatprep.subr.mxu0 0.0
      %794 = vmatpush1.msra.mxu0 0.0
      %795 = vmatprep.subr.mxu0 0.0
      %796 = vmatpush1.msra.mxu0 0.0
      %797 = vmatprep.subr.mxu0 0.0
      %798 = vmatpush1.msra.mxu0 0.0
      %799 = vmatprep.subr.mxu0 0.0
      %800 = vmatpush1.msra.mxu0 0.0
      %801 = vmatprep.subr.mxu0 0.0
      %802 = vmatpush1.msra.mxu0 0.0
      %803 = vmatprep.subr.mxu0 0.0
      %804 = vmatpush1.msra.mxu0 0.0
      %805 = vmatprep.subr.mxu0 0.0
      %806 = vmatpush1.msra.mxu0 0.0
      %807 = vmatprep.subr.mxu0 0.0
      %808 = vmatpush1.msra.mxu0 0.0
      %809 = vmatprep.subr.mxu0 0.0
      %810 = vmatpush1.msra.mxu0 0.0
      %811 = vmatprep.subr.mxu0 0.0
      %812 = vmatpush1.msra.mxu0 0.0
      %813 = vmatprep.mubr.f32.mxu0 0.0
      %814 = vmatmul.mubr.f32.gmra.mrb[0].mxu0 %v738
      %v815 = vpop.f32.mrb[0].mxu0
      %v816 = vadd.f32 %v734, %v815
      %v817 = vpop.f32.mrb[0].mxu0
      %818 = vmatprep.mubr.f32.mxu0 0.0
      %819 = vmatmul.mubr.f32.gmra.mrb[0].mxu0 %v741
      %v820 = vpop.f32.mrb[0].mxu0
      %v821 = vadd.f32 %v734, %v820
      %v822 = vpop.f32.mrb[0].mxu0
      %823 = vmatprep.mubr.f32.mxu0 0.0
      %824 = vmatmul.mubr.f32.gmra.mrb[0].mxu0 %v744
      %v825 = vpop.f32.mrb[0].mxu0
      %v826 = vadd.f32 %v734, %v825
      %v827 = vpop.f32.mrb[0].mxu0
      %828 = vmatprep.mubr.f32.mxu0 0.0
      %829 = vmatmul.mubr.f32.gmra.mrb[0].mxu0 %v747
      %v830 = vpop.f32.mrb[0].mxu0
      %v831 = vadd.f32 %v734, %v830
      %v832 = vpop.f32.mrb[0].mxu0
      %833 = vdwg.mxu0
      %vm834 = vcmask 23552
      %835 = vst.msk [vmem:[%s229] sm:$0xff] %vm834, %v816
      %836 = vst.msk [vmem:[%s229 + $0x8] sm:$0xff] %vm834, %v821
      %837 = vst.msk [vmem:[%s229 + $0x10] sm:$0xff] %vm834, %v826
      %838 = vst.msk [vmem:[%s229 + $0x18] sm:$0xff] %vm834, %v831
      %s839 = smul.u32 4, %s16
      %p840 = scmp.lt.s32.totalorder %s839, 7
      %s841 = scalar_select %p840, %s839, 7
      %s842 = smul.addr %s841, 8
      %s843 = scalar_lea.vmem %s5, %s842
      // Predicated region
      $region41: #{encoder_forward.1} parent=39 // pred_check
        %p844 = pneg %p144
      $region42: #{encoder_forward.1} parent=39 // pred_check_branch
        %846 = sbr.rel (%p844) target = $region44
      $region43: #{encoder_forward.1} parent=39 // pred_region
        %s847 = smul.u32 4, %s16
      $region44: #{encoder_forward.1} parent=39 // pred_fallthru
        _
    $region40: #{encoder_forward.1} parent=5 // pred_fallthru
      _
    %p848 = scmp.le.s32.totalorder 2, %s11
    // Predicated region
    $region45: #{encoder_forward.1} parent=5 // pred_check
      %p849 = pneg %p848
    $region46: #{encoder_forward.1} parent=5 // pred_check_branch
      %851 = sbr.rel (%p849) target = $region48
    $region47: #{encoder_forward.1} parent=5 // pred_region
      %s852 = ssub.s32 %s11, 2
      // Predicated region
      $region49: #{encoder_forward.1} parent=47 // pred_check
        %p853 = pneg %p150
      $region50: #{encoder_forward.1} parent=47 // pred_check_branch
        %855 = sbr.rel (%p853) target = $region52
      $region51: #{encoder_forward.1} parent=47 // pred_region
        %s856 = smul.u32 4, %s17
        %p857 = scmp.lt.s32.totalorder %s856, 7
        %s858 = scalar_select %p857, %s856, 7
        %s859 = smul.addr %s858, 8
        %s860 = scalar_lea.vmem %s5, %s859
      $region52: #{encoder_forward.1} parent=47 // pred_fallthru
        _
    $region48: #{encoder_forward.1} parent=5 // pred_fallthru
      _
  $region6: #{encoder_forward.1} parent=0 // loop_footer
    %s15 = sadd.s32 1, %s11
  $region7: #{encoder_forward.1} parent=0 // loop_footer_branch
    %10 = sbr.rel target = $region3
  $region8: #{encoder_forward.1} parent=0 // loop_exit
    _

</llo_original>
